<compile_context>
chip_gen: v7x
topology: tpu7x:2x2x1
jax: 0.10.0
libtpu: 0.0.40
codegen_flags: <defaults>
</compile_context>

<pallas_src>
import jax
import jax.numpy as jnp
from jax.experimental import pallas as pl
from jax.experimental.pallas import tpu as pltpu


def _round_up(n: int, m: int) -> int:
    return ((n + m - 1) // m) * m


def _cdiv(a: int, b: int) -> int:
    return (a + b - 1) // b


def cp_linear_kernel(x_ref, w1t_ref, w2t_ref, b_ref, o_ref):
    # x_ref  : (tm, in_pad)        lane-dense activation tile
    # w1t_ref: (in_pad, rank_pad)  first factor, pre-transposed + padded (resident)
    # w2t_ref: (rank_pad, tn)      second factor, pre-transposed + padded (N tile)
    # b_ref  : (1, tn)             bias row for this N tile
    # o_ref  : (tm, tn)            lane-dense output tile
    # First projection: (tm, in_pad) @ (in_pad, rank_pad) -> (tm, rank_pad)
    h = jnp.dot(x_ref[...], w1t_ref[...], preferred_element_type=jnp.float32)
    h = h.astype(w2t_ref.dtype)  # no-op in f32; keeps the second dot bf16 on MXU in bf16 mode
    # Second projection: (tm, rank_pad) @ (rank_pad, tn) -> (tm, tn)
    y = jnp.dot(h, w2t_ref[...], preferred_element_type=jnp.float32)
    o_ref[...] = (y + b_ref[...].astype(jnp.float32)).astype(o_ref.dtype)


def cp_linear(x, w1, w2, bias, *, use_bf16=False,
              vmem_budget_bytes=36 * 1024 * 1024):
    """x: (..., in_dim) -> (..., out_dim); fused two-stage (CP-factorized) linear.

    w1: (rank, in_dim), w2: (out_dim, rank), bias: (out_dim,)
    """
    orig_shape = x.shape
    in_dim = orig_shape[-1]
    rank = w1.shape[0]
    out_dim = w2.shape[0]

    out_dtype = x.dtype
    compute_dtype = jnp.bfloat16 if use_bf16 else x.dtype
    c_item = jnp.dtype(compute_dtype).itemsize
    o_item = jnp.dtype(out_dtype).itemsize
    b_item = jnp.dtype(bias.dtype).itemsize

    # ---- lane-dense padding (zero rows / columns: mathematical no-ops) -----
    in_pad = _round_up(in_dim, 128)
    rank_pad = _round_up(rank, 128)
    tn = 512 if out_dim > 512 else _round_up(out_dim, 128)
    out_pad = _round_up(out_dim, tn)
    n_n = out_pad // tn

    x2 = x.reshape(-1, in_dim).astype(compute_dtype)
    M = x2.shape[0]
    if in_pad != in_dim:
        x2 = jnp.pad(x2, ((0, 0), (0, in_pad - in_dim)))

    # One-time weight transposes + padding outside the kernel.
    w1t = jnp.pad(w1.T.astype(compute_dtype),
                  ((0, in_pad - in_dim), (0, rank_pad - rank)))
    w2t = jnp.pad(w2.T.astype(compute_dtype),
                  ((0, rank_pad - rank), (0, out_pad - out_dim)))
    bias2 = jnp.pad(bias, (0, out_pad - out_dim)).reshape(1, out_pad)

    # ---- row-tile sizing against a VMEM budget (safe on v5e/v6e/v7x) -------
    def vmem_need(tm):
        x_b = 2 * tm * in_pad * c_item            # x tile, double buffered
        o_b = 2 * tm * tn * o_item                # out tile, double buffered
        w1_b = 2 * in_pad * rank_pad * c_item     # resident factor 1
        w2_b = 2 * rank_pad * tn * c_item         # factor 2 N-tile
        b_b = 2 * 8 * tn * b_item                 # bias row (sublane padded)
        h_b = tm * rank_pad * 4                   # f32 intermediate
        return x_b + o_b + w1_b + w2_b + b_b + h_b

    tm_target = 1024
    while tm_target > 128 and vmem_need(tm_target) > vmem_budget_bytes:
        tm_target //= 2

    # Balanced M tiles: no more than one near-empty tile worth of zero rows,
    # and at least 2 tiles so a 2-TC chip (v7x) shards the parallel axis.
    n_m = max(1, _cdiv(M, tm_target))
    if n_m == 1 and M > 8:
        n_m = 2
    tm = _round_up(_cdiv(M, n_m), 8)
    M_pad = n_m * tm
    if M_pad != M:
        x2 = jnp.pad(x2, ((0, M_pad - M), (0, 0)))

    vmem_limit = int(min(max(vmem_need(tm) * 1.2, 32 * 1024 * 1024),
                         100 * 1024 * 1024))

    out = pl.pallas_call(
        cp_linear_kernel,
        out_shape=jax.ShapeDtypeStruct((M_pad, out_pad), out_dtype),
        grid_spec=pltpu.PrefetchScalarGridSpec(
            num_scalar_prefetch=0,
            grid=(n_m, n_n),
            in_specs=[
                # x tile: independent of the inner N axis -> stays resident
                pl.BlockSpec((tm, in_pad), lambda i, j: (i, 0)),
                # first factor: constant block index -> resident across grid
                pl.BlockSpec((in_pad, rank_pad), lambda i, j: (0, 0)),
                # second factor + bias: tiled along N only
                pl.BlockSpec((rank_pad, tn), lambda i, j: (0, j)),
                pl.BlockSpec((1, tn), lambda i, j: (0, j)),
            ],
            out_specs=pl.BlockSpec((tm, tn), lambda i, j: (i, j)),
        ),
        compiler_params=pltpu.CompilerParams(
            dimension_semantics=("parallel", "parallel"),
            vmem_limit_bytes=vmem_limit,
        ),
    )(x2, w1t, w2t, bias2)

    out = out[:M, :out_dim]
    return out.reshape(*orig_shape[:-1], out_dim)


if __name__ == "__main__":
    # Small shapes consistent with the module's forward:
    # x: (batch, seq, in_dim), rank-factorized linear in_dim -> rank -> out_dim
    batch, seq, in_dim, rank, out_dim = 2, 8, 32, 8, 16

    key = jax.random.PRNGKey(0)
    kx, k1, k2, kb = jax.random.split(key, 4)

    x = jax.random.normal(kx, (batch, seq, in_dim), dtype=jnp.float32)
    w1 = jax.random.normal(k1, (rank, in_dim), dtype=jnp.float32) * 0.1
    w2 = jax.random.normal(k2, (out_dim, rank), dtype=jnp.float32) * 0.1
    bias = jax.random.normal(kb, (out_dim,), dtype=jnp.float32) * 0.1

    y = cp_linear(x, w1, w2, bias)
    y = jax.block_until_ready(y)

    # Pure-JAX reference of the PyTorch forward semantics.
    y_ref = (x @ w1.T) @ w2.T + bias
    assert y.shape == (batch, seq, out_dim)
    assert jnp.allclose(y, y_ref, atol=1e-5, rtol=1e-5)

    print("KERNEL_OK")
</pallas_src>

<mosaic_0001>
module attributes {stable_mosaic.version = 11 : i64} {
  func.func @cp_linear_kernel(%arg0: i32, %arg1: i32, %arg2: memref<8x128xf32, #tpu.memory_space<vmem>>, %arg3: memref<128x128xf32, #tpu.memory_space<vmem>>, %arg4: memref<128x128xf32, #tpu.memory_space<vmem>>, %arg5: memref<1x128xf32, #tpu.memory_space<vmem>>, %arg6: memref<8x128xf32, #tpu.memory_space<vmem>>) attributes {dimension_semantics = [#tpu.dimension_semantics<parallel>, #tpu.dimension_semantics<parallel>], iteration_bounds = array<i64: 2, 1>, scalar_prefetch = 0 : i64, scratch_operands = 0 : i64, tpu.core_type = #tpu.core_type<tc>, window_params = [{transform_indices = @transform_0, window_bounds = array<i64: 8, 128>}, {pipeline_mode = #tpu.pipeline_mode<synchronous>, transform_indices = @transform_1, window_bounds = array<i64: 128, 128>}, {transform_indices = @transform_2, window_bounds = array<i64: 128, 128>}, {transform_indices = @transform_3, window_bounds = array<i64: 1, 128>}, {transform_indices = @transform_4, window_bounds = array<i64: 8, 128>}]} {
    %c0 = arith.constant 0 : index
    %c0_0 = arith.constant 0 : index
    %0 = vector.load %arg2[%c0, %c0_0] : memref<8x128xf32, #tpu.memory_space<vmem>>, vector<8x128xf32>
    %c0_1 = arith.constant 0 : index
    %c0_2 = arith.constant 0 : index
    %1 = vector.load %arg3[%c0_1, %c0_2] : memref<128x128xf32, #tpu.memory_space<vmem>>, vector<128x128xf32>
    %cst = arith.constant dense<0.000000e+00> : vector<8x128xf32>
    %2 = tpu.matmul %0, %1, %cst {dimension_numbers = #tpu.dot_dimension_numbers<[1], [0], [0], [1], [0, 0, 1, 1], [], []>} : vector<8x128xf32>, vector<128x128xf32>, vector<8x128xf32> -> vector<8x128xf32>
    %c0_3 = arith.constant 0 : index
    %c0_4 = arith.constant 0 : index
    %3 = vector.load %arg4[%c0_3, %c0_4] : memref<128x128xf32, #tpu.memory_space<vmem>>, vector<128x128xf32>
    %cst_5 = arith.constant dense<0.000000e+00> : vector<8x128xf32>
    %4 = tpu.matmul %2, %3, %cst_5 {dimension_numbers = #tpu.dot_dimension_numbers<[1], [0], [0], [1], [0, 0, 1, 1], [], []>} : vector<8x128xf32>, vector<128x128xf32>, vector<8x128xf32> -> vector<8x128xf32>
    %c0_6 = arith.constant 0 : index
    %c0_7 = arith.constant 0 : index
    %5 = vector.load %arg5[%c0_6, %c0_7] : memref<1x128xf32, #tpu.memory_space<vmem>>, vector<1x128xf32>
    %6 = vector.broadcast %5 : vector<1x128xf32> to vector<8x128xf32>
    %7 = arith.addf %4, %6 : vector<8x128xf32>
    %c0_8 = arith.constant 0 : index
    %c0_9 = arith.constant 0 : index
    %8 = vector.load %arg6[%c0_8, %c0_9] : memref<8x128xf32, #tpu.memory_space<vmem>>, vector<8x128xf32>
    tpu.vector_store %arg6[%c0_8, %c0_9], %7 {strides = array<i32>} : memref<8x128xf32, #tpu.memory_space<vmem>>, vector<8x128xf32>,
    return
  }
  func.func @transform_0(%arg0: i32, %arg1: i32) -> (i32, i32) {
    %c0_i32 = arith.constant 0 : i32
    %c0_i32_0 = arith.constant 0 : i32
    return %arg0, %c0_i32 : i32, i32
  }
  func.func @transform_1(%arg0: i32, %arg1: i32) -> (i32, i32) {
    %c0_i32 = arith.constant 0 : i32
    %c0_i32_0 = arith.constant 0 : i32
    %c0_i32_1 = arith.constant 0 : i32
    return %c0_i32, %c0_i32_0 : i32, i32
  }
  func.func @transform_2(%arg0: i32, %arg1: i32) -> (i32, i32) {
    %c0_i32 = arith.constant 0 : i32
    %c0_i32_0 = arith.constant 0 : i32
    return %c0_i32, %arg1 : i32, i32
  }
  func.func @transform_3(%arg0: i32, %arg1: i32) -> (i32, i32) {
    %c0_i32 = arith.constant 0 : i32
    %c0_i32_0 = arith.constant 0 : i32
    return %c0_i32, %arg1 : i32, i32
  }
  func.func @transform_4(%arg0: i32, %arg1: i32) -> (i32, i32) {
    %c0_i32 = arith.constant 0 : i32
    return %arg0, %arg1 : i32, i32
  }
}

</mosaic_0001>

<llo_original>
// kernel: tpu_custom_call.1
$region0: #{tpu_custom_call.1}
  #allocation0 [shape = 'u32[]', space=smem, size = 0x4, offset = 0x4, fixed_abs, tag = 'smem constant byte address 0x4 - core index']
  #allocation1 [shape = 'u32[144,128]{1,0:T(1,128)}', space=vmem, size = 0x12000, scoped, tag = 'internal scratch']
  %s0 = inlined_call_operand.hbm [shape: f32[16,128], index: 0, kind: input, shape index: {}]
  %s1 = inlined_call_operand.hbm [shape: f32[128,128], index: 1, kind: input, shape index: {}]
  %s2 = inlined_call_operand.hbm [shape: f32[128,128], index: 2, kind: input, shape index: {}]
  %s3 = inlined_call_operand.vmem [shape: f32[1,128], index: 3, kind: input, shape index: {}]
  %s4 = inlined_call_operand.hbm [shape: f32[16,128], index: 4, kind: output, shape index: {}]
  %s5 = sld [smem:[#allocation0]]
  $region61: #{tpu_custom_call.1} parent=0
    _
  %s7 = ssub.s32 1, %s5
  %s8 = scalar_select 0, %s7, %s5
  $region1: #{tpu_custom_call.1} parent=0
    #allocation2 [shape = 'u8[8192]{0}', space=vmem, size = 0x2000, scoped, tag = 'input window, operand 0']
    #allocation3 [shape = 's32[2]{0}', space=sflag, size = 0x8, scoped, tag = 'scoped memory for tpu_custom_call.1']
    #allocation4 [shape = 's32[2]{0}', space=sflag, size = 0x8, scoped, tag = 'scoped memory for tpu_custom_call.1']
    #allocation5 [shape = 'u8[65536]{0}', space=vmem, size = 0x10000, scoped, tag = 'input window, operand 1, single buffered']
    #allocation6 [shape = 's32[1]{0}', space=sflag, size = 0x4, scoped, tag = 'scoped memory for tpu_custom_call.1']
    #allocation7 [shape = 'u8[65536]{0}', space=vmem, size = 0x10000, scoped, tag = 'input window, operand 2, single buffered']
    #allocation8 [shape = 'u8[8192]{0}', space=vmem, size = 0x2000, scoped, tag = 'output window, operand 0']
    %9 = vsyncpa [#allocation3], 0
    %s10 = scalar_lea.sflag [#allocation3], 1
    %11 = vsyncpa %s10, 0
    %12 = vsyncpa [#allocation6], 0
    %13 = vsyncpa [#allocation4], 0
    %s14 = scalar_lea.sflag [#allocation4], 1
    %15 = vsyncpa %s14, 0
    loop: start=0, step=1, limit=4
    $region2: #{tpu_custom_call.1} parent=1 // loop_pre_header
      _
    $region3: #{tpu_custom_call.1} parent=1 // loop_header
      %s17 = sphi 0, %s21
      %p18 = scmp.ge.s32.totalorder %s17, 4
      %s24 = sphi 0, %s36
      %s25 = sphi 0, %s32
      %s26 = sphi 0, %s24
      %s27 = sphi 0, %s25
      %s28 = sphi 0, %s26
      %s29 = sphi 0, %s27
      %s39 = sphi 0, %s41
      %s42 = sphi 0, %s39
      %s43 = sphi 0, %s42
      %s59 = sphi 0, %s43
      %s63 = sphi 0, %s63
      %s65 = sphi 0, %s63
      %s66 = sphi 0, %s65
      %s80 = sphi 0, %s66
      %s86 = sphi 0, %s88
      %s89 = sphi 0, %s86
      %s90 = sphi 0, %s89
      %s106 = sphi 0, %s90
      %s112 = sphi 0, %s114
      %s115 = sphi 0, %s112
      %s116 = sphi 0, %s115
      %s132 = sphi 0, %s116
      %s140 = sphi 0, %s142
      %s143 = sphi 0, %s140
      %s144 = sphi 0, %s143
      %s160 = sphi 0, %s144
    $region4: #{tpu_custom_call.1} parent=1 // loop_header_branch
      %20 = sbr.rel (%p18) target = $region8
    $region5: #{tpu_custom_call.1} parent=1 // loop_body
      %s22 = ssub.s32 %s17, 1
      %s23 = ssub.s32 %s17, 2
      %s30 = sadd.s32 1, %s25
      %p31 = scmp.ge.s32.totalorder %s30, 1
      %s32 = scalar_select %p31, 0, %s30
      %s33 = sadd.s32 1, %s24
      %s34 = scalar_select %p31, %s33, %s24
      %p35 = scmp.ge.s32.totalorder %s34, 2
      %s36 = scalar_select %p35, 0, %s34
      %s37 = ssub.s32 %s24, %s36
      %p38 = scmp.eq.s32.totalorder %s37, 0
      %s40 = sadd.s32 %s39, 1
      %s41 = scalar_select %p38, %s39, %s40
      %p44 = pneg %p38
      %p45 = scmp.eq.s32.totalorder %s17, 1
      %p46 = por %p44, %p45
      %p47 = scmp.ne.s32.totalorder %s39, %s42
      %p48 = scmp.eq.s32.totalorder %s17, 0
      %p49 = por %p47, %p48
      %p50 = scmp.ne.s32.totalorder %s39, %s42
      %p51 = scmp.eq.s32.totalorder %s22, 1
      %p52 = por %p50, %p51
      %p53 = scmp.ne.s32.totalorder %s42, %s43
      %p54 = scmp.eq.s32.totalorder %s22, 0
      %p55 = por %p53, %p54
      %p56 = scmp.ne.s32.totalorder %s42, %s43
      %p57 = scmp.eq.s32.totalorder %s23, 1
      %p58 = por %p56, %p57
      %p60 = scmp.ne.s32.totalorder %s43, %s59
      %p61 = scmp.eq.s32.totalorder %s23, 0
      %p62 = por %p60, %p61
      %s64 = sadd.s32 %s63, 1
      %p67 = scmp.eq.s32.totalorder %s17, 1
      %p68 = scmp.ne.s32.totalorder %s63, %s65
      %p69 = scmp.eq.s32.totalorder %s17, 0
      %p70 = por %p68, %p69
      %p71 = scmp.ne.s32.totalorder %s63, %s65
      %p72 = scmp.eq.s32.totalorder %s22, 1
      %p73 = por %p71, %p72
      %p74 = scmp.ne.s32.totalorder %s65, %s66
      %p75 = scmp.eq.s32.totalorder %s22, 0
      %p76 = por %p74, %p75
      %p77 = scmp.ne.s32.totalorder %s65, %s66
      %p78 = scmp.eq.s32.totalorder %s23, 1
      %p79 = por %p77, %p78
      %p81 = scmp.ne.s32.totalorder %s66, %s80
      %p82 = scmp.eq.s32.totalorder %s23, 0
      %p83 = por %p81, %p82
      %s84 = ssub.s32 %s25, %s32
      %p85 = scmp.eq.s32.totalorder %s84, 0
      %s87 = sadd.s32 %s86, 1
      %s88 = scalar_select %p85, %s86, %s87
      %p91 = pneg %p85
      %p92 = scmp.eq.s32.totalorder %s17, 1
      %p93 = por %p91, %p92
      %p94 = scmp.ne.s32.totalorder %s86, %s89
      %p95 = scmp.eq.s32.totalorder %s17, 0
      %p96 = por %p94, %p95
      %p97 = scmp.ne.s32.totalorder %s86, %s89
      %p98 = scmp.eq.s32.totalorder %s22, 1
      %p99 = por %p97, %p98
      %p100 = scmp.ne.s32.totalorder %s89, %s90
      %p101 = scmp.eq.s32.totalorder %s22, 0
      %p102 = por %p100, %p101
      %p103 = scmp.ne.s32.totalorder %s89, %s90
      %p104 = scmp.eq.s32.totalorder %s23, 1
      %p105 = por %p103, %p104
      %p107 = scmp.ne.s32.totalorder %s90, %s106
      %p108 = scmp.eq.s32.totalorder %s23, 0
      %p109 = por %p107, %p108
      %s110 = ssub.s32 %s25, %s32
      %p111 = scmp.eq.s32.totalorder %s110, 0
      %s113 = sadd.s32 %s112, 1
      %s114 = scalar_select %p111, %s112, %s113
      %p117 = pneg %p111
      %p118 = scmp.eq.s32.totalorder %s17, 1
      %p119 = por %p117, %p118
      %p120 = scmp.ne.s32.totalorder %s112, %s115
      %p121 = scmp.eq.s32.totalorder %s17, 0
      %p122 = por %p120, %p121
      %p123 = scmp.ne.s32.totalorder %s112, %s115
      %p124 = scmp.eq.s32.totalorder %s22, 1
      %p125 = por %p123, %p124
      %p126 = scmp.ne.s32.totalorder %s115, %s116
      %p127 = scmp.eq.s32.totalorder %s22, 0
      %p128 = por %p126, %p127
      %p129 = scmp.ne.s32.totalorder %s115, %s116
      %p130 = scmp.eq.s32.totalorder %s23, 1
      %p131 = por %p129, %p130
      %p133 = scmp.ne.s32.totalorder %s116, %s132
      %p134 = scmp.eq.s32.totalorder %s23, 0
      %p135 = por %p133, %p134
      %s136 = ssub.s32 %s24, %s36
      %s137 = ssub.s32 %s25, %s32
      %s138 = sor.u32 %s136, %s137
      %p139 = scmp.eq.s32.totalorder %s138, 0
      %s141 = sadd.s32 %s140, 1
      %s142 = scalar_select %p139, %s140, %s141
      %p145 = pneg %p139
      %p146 = scmp.eq.s32.totalorder %s17, 1
      %p147 = por %p145, %p146
      %p148 = scmp.ne.s32.totalorder %s140, %s143
      %p149 = scmp.eq.s32.totalorder %s17, 0
      %p150 = por %p148, %p149
      %p151 = scmp.ne.s32.totalorder %s140, %s143
      %p152 = scmp.eq.s32.totalorder %s22, 1
      %p153 = por %p151, %p152
      %p154 = scmp.ne.s32.totalorder %s143, %s144
      %p155 = scmp.eq.s32.totalorder %s22, 0
      %p156 = por %p154, %p155
      %p157 = scmp.ne.s32.totalorder %s143, %s144
      %p158 = scmp.eq.s32.totalorder %s23, 1
      %p159 = por %p157, %p158
      %p161 = scmp.ne.s32.totalorder %s144, %s160
      %p162 = scmp.eq.s32.totalorder %s23, 0
      %p163 = por %p161, %p162
      %p164 = scmp.le.s32.totalorder 1, %s17
      %p165 = scmp.lt.s32.totalorder %s17, 3
      %p166 = pnand %p164, %p165
      %p167 = pneg %p166
      // Predicated region
      $region9: #{tpu_custom_call.1} parent=5 // pred_check
        _
      $region10: #{tpu_custom_call.1} parent=5 // pred_check_branch
        %169 = sbr.rel (%p166) target = $region12
      $region11: #{tpu_custom_call.1} parent=5 // pred_region
        %s170 = ssub.s32 %s17, 1
        // Predicated region
        $region13: #{tpu_custom_call.1} parent=11 // pred_check
          %p171 = pneg %p76
        $region14: #{tpu_custom_call.1} parent=11 // pred_check_branch
          %173 = sbr.rel (%p171) target = $region16
        $region15: #{tpu_custom_call.1} parent=11 // pred_region
          %s175 = ssub.s32 2048, 2048
          %176 = vsyncadd [#allocation6], %s175
          %s177 = sshll.u32 [#allocation5], 4
          %s178 = int_to_ptr.vmem [resolvable:$true] %s177
          %183 = dma.hbm_to_vmem [thread:$0]  %s1, 2048, %s178, [#allocation6], 128, 128, 8
        $region16: #{tpu_custom_call.1} parent=11 // pred_fallthru
          _
        // Predicated region
        $region17: #{tpu_custom_call.1} parent=11 // pred_check
          %p184 = pneg %p102
        $region18: #{tpu_custom_call.1} parent=11 // pred_check_branch
          %186 = sbr.rel (%p184) target = $region20
        $region19: #{tpu_custom_call.1} parent=11 // pred_region
          %s188 = ssub.s32 2048, 2048
          %189 = vsyncadd [#allocation6], %s188
          %s190 = smul.addr %s27, 128
          %s191 = scalar_lea.hbm %s2, %s190
          %s192 = sshll.u32 [#allocation7], 4
          %s193 = int_to_ptr.vmem [resolvable:$true] %s192
          %198 = dma.hbm_to_vmem [thread:$0]  %s191, 2048, %s193, [#allocation6], 128, 128, 8
        $region20: #{tpu_custom_call.1} parent=11 // pred_fallthru
          _
        // Predicated region
        $region21: #{tpu_custom_call.1} parent=11 // pred_check
          %p199 = pneg %p128
        $region22: #{tpu_custom_call.1} parent=11 // pred_check_branch
          %201 = sbr.rel (%p199) target = $region24
        $region23: #{tpu_custom_call.1} parent=11 // pred_region
          %p202 = scmp.lt.s32.totalorder %s27, 0
          %s203 = scalar_select %p202, %s27, 0
          %s204 = scalar_lea.vmem %s3, %s203
        $region24: #{tpu_custom_call.1} parent=11 // pred_fallthru
          _
      $region12: #{tpu_custom_call.1} parent=5 // pred_fallthru
        _
      %p205 = scmp.lt.s32.totalorder %s17, 2
      // Predicated region
      $region25: #{tpu_custom_call.1} parent=5 // pred_check
        %p206 = pneg %p205
      $region26: #{tpu_custom_call.1} parent=5 // pred_check_branch
        %208 = sbr.rel (%p206) target = $region28
      $region27: #{tpu_custom_call.1} parent=5 // pred_region
        // Predicated region
        $region29: #{tpu_custom_call.1} parent=27 // pred_check
          %p209 = pneg %p49
        $region30: #{tpu_custom_call.1} parent=27 // pred_check_branch
          %211 = sbr.rel (%p209) target = $region32
        $region31: #{tpu_custom_call.1} parent=27 // pred_region
          %s212 = sand.u32 %s39, 1
          %s213 = scalar_lea.sflag [#allocation3], %s212
          %s214 = sand.u32 %s39, 1
          %s215 = smul.addr %s214, 8
          %s216 = scalar_lea.vmem [#allocation2], %s215
          %s218 = ssub.s32 128, 128
          %219 = vsyncadd %s213, %s218
          %s220 = smul.addr %s24, 128
          %s221 = scalar_lea.hbm %s0, %s220
          %s223 = sshll.u32 %s216, 4
          %s224 = int_to_ptr.vmem [resolvable:$true] %s223
          %226 = dma.hbm_to_vmem [thread:$0]  %s221, 128, %s224, %s213
        $region32: #{tpu_custom_call.1} parent=27 // pred_fallthru
          _
      $region28: #{tpu_custom_call.1} parent=5 // pred_fallthru
        _
      %p227 = scmp.le.s32.totalorder 1, %s17
      %p228 = scmp.lt.s32.totalorder %s17, 3
      %p229 = pnand %p227, %p228
      %p230 = pneg %p229
      // Predicated region
      $region33: #{tpu_custom_call.1} parent=5 // pred_check
        _
      $region34: #{tpu_custom_call.1} parent=5 // pred_check_branch
        %232 = sbr.rel (%p229) target = $region36
      $region35: #{tpu_custom_call.1} parent=5 // pred_region
        %s233 = ssub.s32 %s17, 1
        %s234 = sand.u32 %s42, 1
        %s235 = scalar_lea.sflag [#allocation3], %s234
        %s236 = sand.u32 %s42, 1
        %s237 = smul.addr %s236, 8
        %s238 = scalar_lea.vmem [#allocation2], %s237
        // Predicated region
        $region37: #{tpu_custom_call.1} parent=35 // pred_check
          %p239 = pneg %p55
        $region38: #{tpu_custom_call.1} parent=35 // pred_check_branch
          %241 = sbr.rel (%p239) target = $region40
        $region39: #{tpu_custom_call.1} parent=35 // pred_region
          %242 = dma.done %s235, 128
        $region40: #{tpu_custom_call.1} parent=35 // pred_fallthru
          _
        // Predicated region
        $region41: #{tpu_custom_call.1} parent=35 // pred_check
          %p243 = pneg %p76
        $region42: #{tpu_custom_call.1} parent=35 // pred_check_branch
          %245 = sbr.rel (%p243) target = $region44
        $region43: #{tpu_custom_call.1} parent=35 // pred_region
          %246 = dma.done [#allocation6], 2048
        $region44: #{tpu_custom_call.1} parent=35 // pred_fallthru
          _
        // Predicated region
        $region45: #{tpu_custom_call.1} parent=35 // pred_check
          %p247 = pneg %p102
        $region46: #{tpu_custom_call.1} parent=35 // pred_check_branch
          %249 = sbr.rel (%p247) target = $region48
        $region47: #{tpu_custom_call.1} parent=35 // pred_region
          %250 = dma.done [#allocation6], 2048
        $region48: #{tpu_custom_call.1} parent=35 // pred_fallthru
          _
        %s251 = sand.u32 %s42, 1
        %s252 = scalar_lea.sflag [#allocation3], %s251
        %s253 = sand.u32 %s42, 1
        %s254 = smul.addr %s253, 8
        %s255 = scalar_lea.vmem [#allocation2], %s254
        %p256 = pneg %p55
        %p257 = pneg %p52
        %p258 = pneg %p76
        %p259 = pneg %p73
        %p260 = pneg %p102
        %p261 = pneg %p99
        %p262 = scmp.lt.s32.totalorder %s27, 0
        %s263 = scalar_select %p262, %s27, 0
        %s264 = scalar_lea.vmem %s3, %s263
        %p265 = pneg %p128
        %p266 = pneg %p125
        %p267 = pneg %p156
        %p268 = pneg %p153
        %s269 = sand.u32 %s143, 1
        %s270 = scalar_lea.sflag [#allocation4], %s269
        %s271 = sand.u32 %s143, 1
        %s272 = smul.addr %s271, 8
        %s273 = scalar_lea.vmem [#allocation8], %s272
        %p274 = scmp.lt.s32.totalorder %s27, 0
        %s275 = scalar_select %p274, %s27, 0
        %s276 = scalar_lea.vmem %s3, %s275
        %v277 = vld [vmem:[%s238] sm:$0xff]
        %v278 = vld [vmem:[#allocation5] sm:$0xff]
        %v279 = vld [vmem:[#allocation5 + $0x8] sm:$0xff]
        %v280 = vld [vmem:[#allocation5 + $0x10] sm:$0xff]
        %v281 = vld [vmem:[#allocation5 + $0x18] sm:$0xff]
        %v282 = vld [vmem:[#allocation5 + $0x20] sm:$0xff]
        %v283 = vld [vmem:[#allocation5 + $0x28] sm:$0xff]
        %v284 = vld [vmem:[#allocation5 + $0x30] sm:$0xff]
        %v285 = vld [vmem:[#allocation5 + $0x38] sm:$0xff]
        %v286 = vld [vmem:[#allocation5 + $0x40] sm:$0xff]
        %v287 = vld [vmem:[#allocation5 + $0x48] sm:$0xff]
        %v288 = vld [vmem:[#allocation5 + $0x50] sm:$0xff]
        %v289 = vld [vmem:[#allocation5 + $0x58] sm:$0xff]
        %v290 = vld [vmem:[#allocation5 + $0x60] sm:$0xff]
        %v291 = vld [vmem:[#allocation5 + $0x68] sm:$0xff]
        %v292 = vld [vmem:[#allocation5 + $0x70] sm:$0xff]
        %v293 = vld [vmem:[#allocation5 + $0x78] sm:$0xff]
        %294 = vmatprep.subr.mxu0 0.0
        %295 = vmatpush1.msra.mxu0 %v278
        %296 = vmatprep.subr.mxu0 0.0
        %297 = vmatpush1.msra.mxu0 %v279
        %298 = vmatprep.subr.mxu0 0.0
        %299 = vmatpush1.msra.mxu0 %v280
        %300 = vmatprep.subr.mxu0 0.0
        %301 = vmatpush1.msra.mxu0 %v281
        %302 = vmatprep.subr.mxu0 0.0
        %303 = vmatpush1.msra.mxu0 %v282
        %304 = vmatprep.subr.mxu0 0.0
        %305 = vmatpush1.msra.mxu0 %v283
        %306 = vmatprep.subr.mxu0 0.0
        %307 = vmatpush1.msra.mxu0 %v284
        %308 = vmatprep.subr.mxu0 0.0
        %309 = vmatpush1.msra.mxu0 %v285
        %310 = vmatprep.subr.mxu0 0.0
        %311 = vmatpush1.msra.mxu0 %v286
        %312 = vmatprep.subr.mxu0 0.0
        %313 = vmatpush1.msra.mxu0 %v287
        %314 = vmatprep.subr.mxu0 0.0
        %315 = vmatpush1.msra.mxu0 %v288
        %316 = vmatprep.subr.mxu0 0.0
        %317 = vmatpush1.msra.mxu0 %v289
        %318 = vmatprep.subr.mxu0 0.0
        %319 = vmatpush1.msra.mxu0 %v290
        %320 = vmatprep.subr.mxu0 0.0
        %321 = vmatpush1.msra.mxu0 %v291
        %322 = vmatprep.subr.mxu0 0.0
        %323 = vmatpush1.msra.mxu0 %v292
        %324 = vmatprep.subr.mxu0 0.0
        %325 = vmatpush1.msra.mxu0 %v293
        %326 = vmatprep.subr.mxu0 0.0
        %327 = vmatpush1.msra.mxu0 0.0
        %328 = vmatprep.subr.mxu0 0.0
        %329 = vmatpush1.msra.mxu0 0.0
        %330 = vmatprep.subr.mxu0 0.0
        %331 = vmatpush1.msra.mxu0 0.0
        %332 = vmatprep.subr.mxu0 0.0
        %333 = vmatpush1.msra.mxu0 0.0
        %334 = vmatprep.subr.mxu0 0.0
        %335 = vmatpush1.msra.mxu0 0.0
        %336 = vmatprep.subr.mxu0 0.0
        %337 = vmatpush1.msra.mxu0 0.0
        %338 = vmatprep.subr.mxu0 0.0
        %339 = vmatpush1.msra.mxu0 0.0
        %340 = vmatprep.subr.mxu0 0.0
        %341 = vmatpush1.msra.mxu0 0.0
        %342 = vmatprep.subr.mxu0 0.0
        %343 = vmatpush1.msra.mxu0 0.0
        %344 = vmatprep.subr.mxu0 0.0
        %345 = vmatpush1.msra.mxu0 0.0
        %346 = vmatprep.subr.mxu0 0.0
        %347 = vmatpush1.msra.mxu0 0.0
        %348 = vmatprep.subr.mxu0 0.0
        %349 = vmatpush1.msra.mxu0 0.0
        %350 = vmatprep.subr.mxu0 0.0
        %351 = vmatpush1.msra.mxu0 0.0
        %352 = vmatprep.subr.mxu0 0.0
        %353 = vmatpush1.msra.mxu0 0.0
        %354 = vmatprep.subr.mxu0 0.0
        %355 = vmatpush1.msra.mxu0 0.0
        %356 = vmatprep.subr.mxu0 0.0
        %357 = vmatpush1.msra.mxu0 0.0
        %358 = vmatprep.mubr.f32.mxu0 0.0
        %359 = vmatmul.mubr.f32.gmra.mrb[0].mxu0 %v277
        %v360 = vpop.f32.mrb[0].mxu0
        %v361 = vadd.f32 0.0, %v360
        %v362 = vpop.f32.mrb[0].mxu0
        %363 = vdwg.mxu0
        %v364 = vld [vmem:[#allocation7] sm:$0xff]
        %v365 = vld [vmem:[#allocation7 + $0x8] sm:$0xff]
        %v366 = vld [vmem:[#allocation7 + $0x10] sm:$0xff]
        %v367 = vld [vmem:[#allocation7 + $0x18] sm:$0xff]
        %v368 = vld [vmem:[#allocation7 + $0x20] sm:$0xff]
        %v369 = vld [vmem:[#allocation7 + $0x28] sm:$0xff]
        %v370 = vld [vmem:[#allocation7 + $0x30] sm:$0xff]
        %v371 = vld [vmem:[#allocation7 + $0x38] sm:$0xff]
        %v372 = vld [vmem:[#allocation7 + $0x40] sm:$0xff]
        %v373 = vld [vmem:[#allocation7 + $0x48] sm:$0xff]
        %v374 = vld [vmem:[#allocation7 + $0x50] sm:$0xff]
        %v375 = vld [vmem:[#allocation7 + $0x58] sm:$0xff]
        %v376 = vld [vmem:[#allocation7 + $0x60] sm:$0xff]
        %v377 = vld [vmem:[#allocation7 + $0x68] sm:$0xff]
        %v378 = vld [vmem:[#allocation7 + $0x70] sm:$0xff]
        %v379 = vld [vmem:[#allocation7 + $0x78] sm:$0xff]
        %v380 = vld [vmem:[%s276] sm:$0x1]
        %v382 = vlaneseq
        %v383 = vshrl.u32 %v382, 7
        %v384 = vsub.s32 0, %v383
        %v385 = vrot.slane %v380, %v384
        %387 = vmatprep.subr.mxu0 0.0
        %388 = vmatpush1.msra.mxu0 %v364
        %389 = vmatprep.subr.mxu0 0.0
        %390 = vmatpush1.msra.mxu0 %v365
        %391 = vmatprep.subr.mxu0 0.0
        %392 = vmatpush1.msra.mxu0 %v366
        %393 = vmatprep.subr.mxu0 0.0
        %394 = vmatpush1.msra.mxu0 %v367
        %395 = vmatprep.subr.mxu0 0.0
        %396 = vmatpush1.msra.mxu0 %v368
        %397 = vmatprep.subr.mxu0 0.0
        %398 = vmatpush1.msra.mxu0 %v369
        %399 = vmatprep.subr.mxu0 0.0
        %400 = vmatpush1.msra.mxu0 %v370
        %401 = vmatprep.subr.mxu0 0.0
        %402 = vmatpush1.msra.mxu0 %v371
        %403 = vmatprep.subr.mxu0 0.0
        %404 = vmatpush1.msra.mxu0 %v372
        %405 = vmatprep.subr.mxu0 0.0
        %406 = vmatpush1.msra.mxu0 %v373
        %407 = vmatprep.subr.mxu0 0.0
        %408 = vmatpush1.msra.mxu0 %v374
        %409 = vmatprep.subr.mxu0 0.0
        %410 = vmatpush1.msra.mxu0 %v375
        %411 = vmatprep.subr.mxu0 0.0
        %412 = vmatpush1.msra.mxu0 %v376
        %413 = vmatprep.subr.mxu0 0.0
        %414 = vmatpush1.msra.mxu0 %v377
        %415 = vmatprep.subr.mxu0 0.0
        %416 = vmatpush1.msra.mxu0 %v378
        %417 = vmatprep.subr.mxu0 0.0
        %418 = vmatpush1.msra.mxu0 %v379
        %419 = vmatprep.subr.mxu0 0.0
        %420 = vmatpush1.msra.mxu0 0.0
        %421 = vmatprep.subr.mxu0 0.0
        %422 = vmatpush1.msra.mxu0 0.0
        %423 = vmatprep.subr.mxu0 0.0
        %424 = vmatpush1.msra.mxu0 0.0
        %425 = vmatprep.subr.mxu0 0.0
        %426 = vmatpush1.msra.mxu0 0.0
        %427 = vmatprep.subr.mxu0 0.0
        %428 = vmatpush1.msra.mxu0 0.0
        %429 = vmatprep.subr.mxu0 0.0
        %430 = vmatpush1.msra.mxu0 0.0
        %431 = vmatprep.subr.mxu0 0.0
        %432 = vmatpush1.msra.mxu0 0.0
        %433 = vmatprep.subr.mxu0 0.0
        %434 = vmatpush1.msra.mxu0 0.0
        %435 = vmatprep.subr.mxu0 0.0
        %436 = vmatpush1.msra.mxu0 0.0
        %437 = vmatprep.subr.mxu0 0.0
        %438 = vmatpush1.msra.mxu0 0.0
        %439 = vmatprep.subr.mxu0 0.0
        %440 = vmatpush1.msra.mxu0 0.0
        %441 = vmatprep.subr.mxu0 0.0
        %442 = vmatpush1.msra.mxu0 0.0
        %443 = vmatprep.subr.mxu0 0.0
        %444 = vmatpush1.msra.mxu0 0.0
        %445 = vmatprep.subr.mxu0 0.0
        %446 = vmatpush1.msra.mxu0 0.0
        %447 = vmatprep.subr.mxu0 0.0
        %448 = vmatpush1.msra.mxu0 0.0
        %449 = vmatprep.subr.mxu0 0.0
        %450 = vmatpush1.msra.mxu0 0.0
        %451 = vmatprep.mubr.f32.mxu0 0.0
        %452 = vmatmul.mubr.f32.gmra.mrb[0].mxu0 %v361
        %v453 = vpop.f32.mrb[0].mxu0
        %v454 = vadd.f32 %v385, %v453
        %v455 = vpop.f32.mrb[0].mxu0
        %456 = vdwg.mxu0
        %457 = vst [vmem:[%s273] sm:$0xff] %v454
        %s458 = sand.u32 %s143, 1
        %s459 = scalar_lea.sflag [#allocation4], %s458
        %s460 = sand.u32 %s143, 1
        %s461 = smul.addr %s460, 8
        %s462 = scalar_lea.vmem [#allocation8], %s461
        // Predicated region
        $region49: #{tpu_custom_call.1} parent=35 // pred_check
          %p463 = pneg %p153
        $region50: #{tpu_custom_call.1} parent=35 // pred_check_branch
          %465 = sbr.rel (%p463) target = $region52
        $region51: #{tpu_custom_call.1} parent=35 // pred_region
          %s467 = ssub.s32 128, 128
          %468 = vsyncadd %s459, %s467
          %s469 = sadd.s32 %s27, %s26
          %s470 = smul.addr %s469, 128
          %s471 = scalar_lea.hbm %s4, %s470
          %s473 = sshll.u32 %s462, 4
          %s474 = int_to_ptr.vmem [resolvable:$true] %s473
          %476 = dma.vmem_to_hbm [thread:$0]  %s474, 128, %s471, %s459
        $region52: #{tpu_custom_call.1} parent=35 // pred_fallthru
          _
      $region36: #{tpu_custom_call.1} parent=5 // pred_fallthru
        _
      %p477 = scmp.le.s32.totalorder 2, %s17
      // Predicated region
      $region53: #{tpu_custom_call.1} parent=5 // pred_check
        %p478 = pneg %p477
      $region54: #{tpu_custom_call.1} parent=5 // pred_check_branch
        %480 = sbr.rel (%p478) target = $region56
      $region55: #{tpu_custom_call.1} parent=5 // pred_region
        %s481 = ssub.s32 %s17, 2
        // Predicated region
        $region57: #{tpu_custom_call.1} parent=55 // pred_check
          %p482 = pneg %p159
        $region58: #{tpu_custom_call.1} parent=55 // pred_check_branch
          %484 = sbr.rel (%p482) target = $region60
        $region59: #{tpu_custom_call.1} parent=55 // pred_region
          %s485 = sand.u32 %s144, 1
          %s486 = scalar_lea.sflag [#allocation4], %s485
          %s487 = sand.u32 %s144, 1
          %s488 = smul.addr %s487, 8
          %s489 = scalar_lea.vmem [#allocation8], %s488
          %490 = dma.done %s486, 128
        $region60: #{tpu_custom_call.1} parent=55 // pred_fallthru
          _
      $region56: #{tpu_custom_call.1} parent=5 // pred_fallthru
        _
    $region6: #{tpu_custom_call.1} parent=1 // loop_footer
      %s21 = sadd.s32 1, %s17
    $region7: #{tpu_custom_call.1} parent=1 // loop_footer_branch
      %16 = sbr.rel target = $region3
    $region8: #{tpu_custom_call.1} parent=1 // loop_exit
      _
    %491 = vsyncpa [#allocation3], 1
    %s492 = scalar_lea.sflag [#allocation3], 1
    %493 = vsyncpa %s492, 1
    %494 = vsyncpa [#allocation6], 1
    %495 = vsyncpa [#allocation4], 1
    %s496 = scalar_lea.sflag [#allocation4], 1
    %497 = vsyncpa %s496, 1

</llo_original>
